<compile_context>
chip_gen: v6e
topology: v6e:2x2x1
jax: 0.10.0
libtpu: 0.0.40
codegen_flags: <defaults>
</compile_context>

<pallas_src>
import math

import jax
import jax.numpy as jnp
from jax import lax
from jax.experimental import pallas as pl
from jax.experimental.pallas import tpu as pltpu

# ---------------- problem sizes (consistent with TransGAN_8_8: 8x8 tokens) ----
B = 2              # batch
N = 64             # tokens
C = 32             # in_features = out_features (embed dim)
MLP_RATIO = 4
HIDDEN = C * MLP_RATIO   # 128
BN = B * N               # 128 rows after fusing the batch


def _gelu_erf(x):
    # exact-erf GELU, matching the PyTorch reference gelu()
    return x * 0.5 * (1.0 + lax.erf(x * (1.0 / math.sqrt(2.0))))


def mlp_kernel(x_ref, w1_ref, w2_ref, bias_ref, out_ref):
    # Natural layout: y = gelu(x @ W1 + b1) @ W2 + b2
    x = x_ref[...]                          # (BN, C)      = (128, 32)  f32
    w1 = w1_ref[...]                        # (C, HIDDEN)  = (32, 128)  f32
    w2 = w2_ref[...]                        # (HIDDEN, C)  = (128, 32)  f32

    c_out = out_ref.shape[-1]
    b1 = bias_ref[0:1, :]                   # (1, HIDDEN) row vector (lane-dense)
    b2 = bias_ref[1:2, 0:c_out]             # (1, C)      row vector

    # bf16 MXU operands, f32 accumulation; elementwise math stays f32.
    h = jnp.dot(x.astype(jnp.bfloat16), w1.astype(jnp.bfloat16),
                preferred_element_type=jnp.float32) + b1        # (BN, HIDDEN) f32
    h = _gelu_erf(h)
    y = jnp.dot(h.astype(jnp.bfloat16), w2.astype(jnp.bfloat16),
                preferred_element_type=jnp.float32) + b2        # (BN, C) f32

    out_ref[...] = y


def _full(shape):
    nd = len(shape)
    return pl.BlockSpec(shape, lambda i, _nd=nd: (0,) * _nd)


def mlp_pallas(x, w1, b1, w2, b2):
    """x: (B, N, C); w1: (C, HIDDEN); b1: (HIDDEN,); w2: (HIDDEN, C); b2: (C,)."""
    Bv, Nv, Cin = x.shape
    hidden = w1.shape[1]
    bn = Bv * Nv

    x2d = x.reshape(bn, Cin)                                     # free (row-major)
    # Lane-dense packed biases: row 0 = b1, row 1 = b2 zero-padded to HIDDEN.
    bias = jnp.stack([b1, jnp.pad(b2, (0, hidden - Cin))], axis=0)   # (2, HIDDEN)

    y2d = pl.pallas_call(
        mlp_kernel,
        out_shape=jax.ShapeDtypeStruct((bn, Cin), jnp.float32),
        grid_spec=pltpu.PrefetchScalarGridSpec(
            num_scalar_prefetch=0,
            grid=(1,),                                 # single fused invocation
            in_specs=[
                _full((bn, Cin)),                      # x
                _full((Cin, hidden)),                  # W1
                _full((hidden, Cin)),                  # W2
                _full((2, hidden)),                    # packed biases
            ],
            out_specs=_full((bn, Cin)),
        ),
        compiler_params=pltpu.CompilerParams(
            dimension_semantics=("arbitrary",)),
    )(x2d, w1, w2, bias)

    return y2d.reshape(Bv, Nv, Cin)


# ---------------- pure-JAX reference (mirrors the PyTorch forward, f32) -------
def reference_mlp(x, w1, b1, w2, b2):
    h = x @ w1 + b1
    h = h * 0.5 * (1.0 + lax.erf(h / math.sqrt(2.0)))
    # Dropout(p=0.0) is identity in both train and eval.
    return h @ w2 + b2


if __name__ == "__main__":
    key = jax.random.PRNGKey(0)
    kx, k1, k2, k3, k4 = jax.random.split(key, 5)

    x = jax.random.normal(kx, (B, N, C), jnp.float32)
    w1 = jax.random.normal(k1, (C, HIDDEN), jnp.float32) * 0.05
    b1 = jax.random.normal(k2, (HIDDEN,), jnp.float32) * 0.01
    w2 = jax.random.normal(k3, (HIDDEN, C), jnp.float32) * 0.05
    b2 = jax.random.normal(k4, (C,), jnp.float32) * 0.01

    out = mlp_pallas(x, w1, b1, w2, b2)
    out = jax.block_until_ready(out)

    ref = reference_mlp(x, w1, b1, w2, b2)
    assert out.shape == (B, N, C)
    err = jnp.max(jnp.abs(out - ref))
    # bf16 MXU operands (f32 accumulation) -> loosened tolerance vs. f32 ref.
    assert jnp.allclose(out, ref, atol=2e-2, rtol=2e-2), f"max abs diff {err}"

    print("KERNEL_OK")
</pallas_src>

<mosaic_0001>
module attributes {stable_mosaic.version = 11 : i64} {
  func.func @mlp_kernel(%arg0: i32, %arg1: memref<128x32xf32, #tpu.memory_space<vmem>>, %arg2: memref<32x128xf32, #tpu.memory_space<vmem>>, %arg3: memref<128x32xf32, #tpu.memory_space<vmem>>, %arg4: memref<2x128xf32, #tpu.memory_space<vmem>>, %arg5: memref<128x32xf32, #tpu.memory_space<vmem>>) attributes {dimension_semantics = [#tpu.dimension_semantics<arbitrary>], iteration_bounds = array<i64: 1>, scalar_prefetch = 0 : i64, scratch_operands = 0 : i64, tpu.core_type = #tpu.core_type<tc>, window_params = [{pipeline_mode = #tpu.pipeline_mode<synchronous>, transform_indices = @transform_0, window_bounds = array<i64: 128, 32>}, {pipeline_mode = #tpu.pipeline_mode<synchronous>, transform_indices = @transform_1, window_bounds = array<i64: 32, 128>}, {pipeline_mode = #tpu.pipeline_mode<synchronous>, transform_indices = @transform_2, window_bounds = array<i64: 128, 32>}, {pipeline_mode = #tpu.pipeline_mode<synchronous>, transform_indices = @transform_3, window_bounds = array<i64: 2, 128>}, {pipeline_mode = #tpu.pipeline_mode<synchronous>, transform_indices = @transform_4, window_bounds = array<i64: 128, 32>}]} {
    %c0 = arith.constant 0 : index
    %c0_0 = arith.constant 0 : index
    %0 = vector.load %arg1[%c0, %c0_0] : memref<128x32xf32, #tpu.memory_space<vmem>>, vector<128x32xf32>
    %c0_1 = arith.constant 0 : index
    %c0_2 = arith.constant 0 : index
    %1 = vector.load %arg2[%c0_1, %c0_2] : memref<32x128xf32, #tpu.memory_space<vmem>>, vector<32x128xf32>
    %c0_3 = arith.constant 0 : index
    %c0_4 = arith.constant 0 : index
    %2 = vector.load %arg3[%c0_3, %c0_4] : memref<128x32xf32, #tpu.memory_space<vmem>>, vector<128x32xf32>
    %c0_5 = arith.constant 0 : index
    %c0_6 = arith.constant 0 : index
    %3 = vector.load %arg4[%c0_5, %c0_6] : memref<2x128xf32, #tpu.memory_space<vmem>>, vector<1x128xf32>
    %c1 = arith.constant 1 : index
    %c0_7 = arith.constant 0 : index
    %4 = vector.load %arg4[%c1, %c0_7] : memref<2x128xf32, #tpu.memory_space<vmem>>, vector<1x32xf32>
    %5 = arith.truncf %0 : vector<128x32xf32> to vector<128x32xbf16>
    %6 = arith.truncf %1 : vector<32x128xf32> to vector<32x128xbf16>
    %cst = arith.constant dense<0.000000e+00> : vector<128x128xf32>
    %7 = tpu.matmul %5, %6, %cst {dimension_numbers = #tpu.dot_dimension_numbers<[1], [0], [0], [1], [0, 0, 1, 1], [], []>} : vector<128x32xbf16>, vector<32x128xbf16>, vector<128x128xf32> -> vector<128x128xf32>
    %8 = vector.broadcast %3 : vector<1x128xf32> to vector<128x128xf32>
    %9 = arith.addf %7, %8 : vector<128x128xf32>
    %cst_8 = arith.constant 5.000000e-01 : f32
    %10 = vector.broadcast %cst_8 : f32 to vector<128x128xf32>
    %11 = arith.mulf %9, %10 : vector<128x128xf32>
    %cst_9 = arith.constant 0.707106769 : f32
    %12 = vector.broadcast %cst_9 : f32 to vector<128x128xf32>
    %13 = arith.mulf %9, %12 : vector<128x128xf32>
    %14 = math.erf %13 : vector<128x128xf32>
    %cst_10 = arith.constant 1.000000e+00 : f32
    %15 = vector.broadcast %cst_10 : f32 to vector<128x128xf32>
    %16 = arith.addf %15, %14 : vector<128x128xf32>
    %17 = arith.mulf %11, %16 : vector<128x128xf32>
    %18 = arith.truncf %17 : vector<128x128xf32> to vector<128x128xbf16>
    %19 = arith.truncf %2 : vector<128x32xf32> to vector<128x32xbf16>
    %cst_11 = arith.constant dense<0.000000e+00> : vector<128x32xf32>
    %20 = tpu.matmul %18, %19, %cst_11 {dimension_numbers = #tpu.dot_dimension_numbers<[1], [0], [0], [1], [0, 0, 1, 1], [], []>} : vector<128x128xbf16>, vector<128x32xbf16>, vector<128x32xf32> -> vector<128x32xf32>
    %21 = vector.broadcast %4 : vector<1x32xf32> to vector<128x32xf32>
    %22 = arith.addf %20, %21 : vector<128x32xf32>
    %c0_12 = arith.constant 0 : index
    %c0_13 = arith.constant 0 : index
    %23 = vector.load %arg5[%c0_12, %c0_13] : memref<128x32xf32, #tpu.memory_space<vmem>>, vector<128x32xf32>
    tpu.vector_store %arg5[%c0_12, %c0_13], %22 {strides = array<i32>} : memref<128x32xf32, #tpu.memory_space<vmem>>, vector<128x32xf32>,
    return
  }
  func.func @transform_0(%arg0: i32) -> (i32, i32) {
    %c0_i32 = arith.constant 0 : i32
    %c0_i32_0 = arith.constant 0 : i32
    %c0_i32_1 = arith.constant 0 : i32
    return %c0_i32, %c0_i32_0 : i32, i32
  }
  func.func @transform_1(%arg0: i32) -> (i32, i32) {
    %c0_i32 = arith.constant 0 : i32
    %c0_i32_0 = arith.constant 0 : i32
    %c0_i32_1 = arith.constant 0 : i32
    return %c0_i32, %c0_i32_0 : i32, i32
  }
  func.func @transform_2(%arg0: i32) -> (i32, i32) {
    %c0_i32 = arith.constant 0 : i32
    %c0_i32_0 = arith.constant 0 : i32
    %c0_i32_1 = arith.constant 0 : i32
    return %c0_i32, %c0_i32_0 : i32, i32
  }
  func.func @transform_3(%arg0: i32) -> (i32, i32) {
    %c0_i32 = arith.constant 0 : i32
    %c0_i32_0 = arith.constant 0 : i32
    %c0_i32_1 = arith.constant 0 : i32
    return %c0_i32, %c0_i32_0 : i32, i32
  }
  func.func @transform_4(%arg0: i32) -> (i32, i32) {
    %c0_i32 = arith.constant 0 : i32
    %c0_i32_0 = arith.constant 0 : i32
    %c0_i32_1 = arith.constant 0 : i32
    return %c0_i32, %c0_i32_0 : i32, i32
  }
}

</mosaic_0001>

<llo_original>
// kernel: tpu_custom_call.1
$region0: #{tpu_custom_call.1}
  #allocation0 [shape = 'u32[]', space=smem, size = 0x4, offset = 0x4, fixed_abs, tag = 'smem constant byte address 0x4 - core index']
  #allocation1 [shape = 'u32[144,128]{1,0:T(1,128)}', space=vmem, size = 0x12000, scoped, tag = 'internal scratch']
  %s0 = inlined_call_operand.vmem [shape: f32[128,32], index: 0, kind: input, shape index: {}]
  %s1 = inlined_call_operand.vmem [shape: f32[32,128], index: 1, kind: input, shape index: {}]
  %s2 = inlined_call_operand.vmem [shape: f32[128,32], index: 2, kind: input, shape index: {}]
  %s3 = inlined_call_operand.vmem [shape: f32[2,128], index: 3, kind: input, shape index: {}]
  %s4 = inlined_call_operand.vmem [shape: f32[128,32], index: 4, kind: output, shape index: {}]
  %s5 = sld [smem:[#allocation0]]
  $region26: #{tpu_custom_call.1} parent=0
    _
  %s7 = ssub.s32 1, %s5
  %s8 = scalar_select 0, %s7, %s5
  // Predicated region
  $region2: #{tpu_custom_call.1} parent=0 // pred_check
    _
  $region3: #{tpu_custom_call.1} parent=0 // pred_check_branch
    %10 = sbr.rel (0) target = $region5
  $region4: #{tpu_custom_call.1} parent=0 // pred_region
    _
  $region5: #{tpu_custom_call.1} parent=0 // pred_fallthru
    _
  // Predicated region
  $region6: #{tpu_custom_call.1} parent=0 // pred_check
    _
  $region7: #{tpu_custom_call.1} parent=0 // pred_check_branch
    %12 = sbr.rel (0) target = $region9
  $region8: #{tpu_custom_call.1} parent=0 // pred_region
    _
  $region9: #{tpu_custom_call.1} parent=0 // pred_fallthru
    _
  // Predicated region
  $region10: #{tpu_custom_call.1} parent=0 // pred_check
    _
  $region11: #{tpu_custom_call.1} parent=0 // pred_check_branch
    %14 = sbr.rel (0) target = $region13
  $region12: #{tpu_custom_call.1} parent=0 // pred_region
    _
  $region13: #{tpu_custom_call.1} parent=0 // pred_fallthru
    _
  // Predicated region
  $region14: #{tpu_custom_call.1} parent=0 // pred_check
    _
  $region15: #{tpu_custom_call.1} parent=0 // pred_check_branch
    %16 = sbr.rel (0) target = $region17
  $region16: #{tpu_custom_call.1} parent=0 // pred_region
    _
  $region17: #{tpu_custom_call.1} parent=0 // pred_fallthru
    _
  %v18 = vld [vmem:[%s0] sm:$0xff]
  %v19 = vld [vmem:[%s0 + $0x8] sm:$0xff]
  %v20 = vld [vmem:[%s0 + $0x10] sm:$0xff]
  %v21 = vld [vmem:[%s0 + $0x18] sm:$0xff]
  %v22 = vld [vmem:[%s0 + $0x20] sm:$0xff]
  %v23 = vld [vmem:[%s0 + $0x28] sm:$0xff]
  %v24 = vld [vmem:[%s0 + $0x30] sm:$0xff]
  %v25 = vld [vmem:[%s0 + $0x38] sm:$0xff]
  %v26 = vld [vmem:[%s0 + $0x40] sm:$0xff]
  %v27 = vld [vmem:[%s0 + $0x48] sm:$0xff]
  %v28 = vld [vmem:[%s0 + $0x50] sm:$0xff]
  %v29 = vld [vmem:[%s0 + $0x58] sm:$0xff]
  %v30 = vld [vmem:[%s0 + $0x60] sm:$0xff]
  %v31 = vld [vmem:[%s0 + $0x68] sm:$0xff]
  %v32 = vld [vmem:[%s0 + $0x70] sm:$0xff]
  %v33 = vld [vmem:[%s0 + $0x78] sm:$0xff]
  %v34 = vld [vmem:[%s1] sm:$0xff]
  %v35 = vld [vmem:[%s1 + $0x8] sm:$0xff]
  %v36 = vld [vmem:[%s1 + $0x10] sm:$0xff]
  %v37 = vld [vmem:[%s1 + $0x18] sm:$0xff]
  %v38 = vld [vmem:[%s2] sm:$0xff]
  %v39 = vld [vmem:[%s2 + $0x8] sm:$0xff]
  %v40 = vld [vmem:[%s2 + $0x10] sm:$0xff]
  %v41 = vld [vmem:[%s2 + $0x18] sm:$0xff]
  %v42 = vld [vmem:[%s2 + $0x20] sm:$0xff]
  %v43 = vld [vmem:[%s2 + $0x28] sm:$0xff]
  %v44 = vld [vmem:[%s2 + $0x30] sm:$0xff]
  %v45 = vld [vmem:[%s2 + $0x38] sm:$0xff]
  %v46 = vld [vmem:[%s2 + $0x40] sm:$0xff]
  %v47 = vld [vmem:[%s2 + $0x48] sm:$0xff]
  %v48 = vld [vmem:[%s2 + $0x50] sm:$0xff]
  %v49 = vld [vmem:[%s2 + $0x58] sm:$0xff]
  %v50 = vld [vmem:[%s2 + $0x60] sm:$0xff]
  %v51 = vld [vmem:[%s2 + $0x68] sm:$0xff]
  %v52 = vld [vmem:[%s2 + $0x70] sm:$0xff]
  %v53 = vld [vmem:[%s2 + $0x78] sm:$0xff]
  %v54 = vld [vmem:[%s3] sm:$0x1]
  %v55 = vld [vmem:[%s3 + $0x1] sm:$0x1]
  %v56 = vpack.c.bf16 %v19, %v18
  %v57 = vpack.c.bf16 %v21, %v20
  %v58 = vpack.c.bf16 %v23, %v22
  %v59 = vpack.c.bf16 %v25, %v24
  %v60 = vpack.c.bf16 %v27, %v26
  %v61 = vpack.c.bf16 %v29, %v28
  %v62 = vpack.c.bf16 %v31, %v30
  %v63 = vpack.c.bf16 %v33, %v32
  %v64 = vpack.c.bf16 %v35, %v34
  %v65 = vpack.c.bf16 %v37, %v36
  %v66 = vlaneseq
  %v67 = vshrl.u32 %v66, 7
  %v68 = vsub.s32 0, %v67
  %v69 = vrot.slane %v54, %v68
  %vm70 = vcmask 261120
  %v72 = vsel %vm70, %v56, 0
  %v75 = vsel %vm70, %v57, 0
  %v78 = vsel %vm70, %v58, 0
  %v81 = vsel %vm70, %v59, 0
  %v84 = vsel %vm70, %v60, 0
  %v87 = vsel %vm70, %v61, 0
  %v90 = vsel %vm70, %v62, 0
  %v93 = vsel %vm70, %v63, 0
  %95 = vmatprep.subr.bf16.mxu0 0
  %96 = vmatpush1.bf16.msra.mxu0 0
  %97 = vmatprep.subr.bf16.mxu0 0
  %98 = vmatpush1.bf16.msra.mxu0 0
  %99 = vmatprep.subr.bf16.mxu0 0
  %100 = vmatpush1.bf16.msra.mxu0 0
  %101 = vmatprep.subr.bf16.mxu0 0
  %102 = vmatpush1.bf16.msra.mxu0 0
  %103 = vmatprep.subr.bf16.mxu0 0
  %104 = vmatpush1.bf16.msra.mxu0 0
  %105 = vmatprep.subr.bf16.mxu0 0
  %106 = vmatpush1.bf16.msra.mxu0 0
  %107 = vmatprep.subr.bf16.mxu0 0
  %108 = vmatpush1.bf16.msra.mxu0 %v65
  %109 = vmatprep.subr.bf16.mxu0 0
  %110 = vmatpush1.bf16.msra.mxu0 %v64
  %111 = vmatprep.subr.bf16.mxu0 0
  %112 = vmatpush2.bf16.msra.mxu0 0
  %113 = vmatprep.subr.bf16.mxu0 0
  %114 = vmatpush2.bf16.msra.mxu0 0
  %115 = vmatprep.subr.bf16.mxu0 0
  %116 = vmatpush2.bf16.msra.mxu0 0
  %117 = vmatprep.subr.bf16.mxu0 0
  %118 = vmatpush2.bf16.msra.mxu0 0
  %119 = vmatprep.subr.bf16.mxu0 0
  %120 = vmatpush2.bf16.msra.mxu0 0
  %121 = vmatprep.subr.bf16.mxu0 0
  %122 = vmatpush2.bf16.msra.mxu0 0
  %123 = vmatprep.subr.bf16.mxu0 0
  %124 = vmatpush2.bf16.msra.mxu0 0
  %125 = vmatprep.subr.bf16.mxu0 0
  %126 = vmatpush2.bf16.msra.mxu0 0
  %127 = vmatprep.mubr.bf16.mxu0 0
  %128 = vmatmul.mubr.bf16.gmra.mxu0 %v72
  %v129 = vpop.f32.mrf.mxu0
  %v130 = vadd.f32 %v69, %v129
  %v131 = vpop.f32.mrf.mxu0
  %v132 = vpop.f32.mrf.mxu0
  %v133 = vadd.f32 %v69, %v132
  %v134 = vpop.f32.mrf.mxu0
  %135 = vmatprep.mubr.bf16.mxu0 0
  %136 = vmatmul.mubr.bf16.gmra.mxu0 %v75
  %v137 = vpop.f32.mrf.mxu0
  %v138 = vadd.f32 %v69, %v137
  %v139 = vpop.f32.mrf.mxu0
  %v140 = vpop.f32.mrf.mxu0
  %v141 = vadd.f32 %v69, %v140
  %v142 = vpop.f32.mrf.mxu0
  %143 = vmatprep.mubr.bf16.mxu0 0
  %144 = vmatmul.mubr.bf16.gmra.mxu0 %v78
  %v145 = vpop.f32.mrf.mxu0
  %v146 = vadd.f32 %v69, %v145
  %v147 = vpop.f32.mrf.mxu0
  %v148 = vpop.f32.mrf.mxu0
  %v149 = vadd.f32 %v69, %v148
  %v150 = vpop.f32.mrf.mxu0
  %151 = vmatprep.mubr.bf16.mxu0 0
  %152 = vmatmul.mubr.bf16.gmra.mxu0 %v81
  %v153 = vpop.f32.mrf.mxu0
  %v154 = vadd.f32 %v69, %v153
  %v155 = vpop.f32.mrf.mxu0
  %v156 = vpop.f32.mrf.mxu0
  %v157 = vadd.f32 %v69, %v156
  %v158 = vpop.f32.mrf.mxu0
  %159 = vmatprep.mubr.bf16.mxu0 0
  %160 = vmatmul.mubr.bf16.gmra.mxu0 %v84
  %v161 = vpop.f32.mrf.mxu0
  %v162 = vadd.f32 %v69, %v161
  %v163 = vpop.f32.mrf.mxu0
  %v164 = vpop.f32.mrf.mxu0
  %v165 = vadd.f32 %v69, %v164
  %v166 = vpop.f32.mrf.mxu0
  %167 = vmatprep.mubr.bf16.mxu0 0
  %168 = vmatmul.mubr.bf16.gmra.mxu0 %v87
  %v169 = vpop.f32.mrf.mxu0
  %v170 = vadd.f32 %v69, %v169
  %v171 = vpop.f32.mrf.mxu0
  %v172 = vpop.f32.mrf.mxu0
  %v173 = vadd.f32 %v69, %v172
  %v174 = vpop.f32.mrf.mxu0
  %175 = vmatprep.mubr.bf16.mxu0 0
  %176 = vmatmul.mubr.bf16.gmra.mxu0 %v90
  %v177 = vpop.f32.mrf.mxu0
  %v178 = vadd.f32 %v69, %v177
  %v179 = vpop.f32.mrf.mxu0
  %v180 = vpop.f32.mrf.mxu0
  %v181 = vadd.f32 %v69, %v180
  %v182 = vpop.f32.mrf.mxu0
  %183 = vmatprep.mubr.bf16.mxu0 0
  %184 = vmatmul.mubr.bf16.gmra.mxu0 %v93
  %v185 = vpop.f32.mrf.mxu0
  %v186 = vadd.f32 %v69, %v185
  %v187 = vpop.f32.mrf.mxu0
  %v188 = vpop.f32.mrf.mxu0
  %v189 = vadd.f32 %v69, %v188
  %v190 = vpop.f32.mrf.mxu0
  %191 = vdwg.mxu0
  %v192 = vmul.f32 %v130, 0.5
  %v193 = vmul.f32 %v133, 0.5
  %v194 = vmul.f32 %v138, 0.5
  %v195 = vmul.f32 %v141, 0.5
  %v196 = vmul.f32 %v146, 0.5
  %v197 = vmul.f32 %v149, 0.5
  %v198 = vmul.f32 %v154, 0.5
  %v199 = vmul.f32 %v157, 0.5
  %v200 = vmul.f32 %v162, 0.5
  %v201 = vmul.f32 %v165, 0.5
  %v202 = vmul.f32 %v170, 0.5
  %v203 = vmul.f32 %v173, 0.5
  %v204 = vmul.f32 %v178, 0.5
  %v205 = vmul.f32 %v181, 0.5
  %v206 = vmul.f32 %v186, 0.5
  %v207 = vmul.f32 %v189, 0.5
  %v208 = vmul.f32 %v130, 0.70710677
  %v209 = vmul.f32 %v133, 0.70710677
  %v210 = vmul.f32 %v138, 0.70710677
  %v211 = vmul.f32 %v141, 0.70710677
  %v212 = vmul.f32 %v146, 0.70710677
  %v213 = vmul.f32 %v149, 0.70710677
  %v214 = vmul.f32 %v154, 0.70710677
  %v215 = vmul.f32 %v157, 0.70710677
  %v216 = vmul.f32 %v162, 0.70710677
  %v217 = vmul.f32 %v165, 0.70710677
  %v218 = vmul.f32 %v170, 0.70710677
  %v219 = vmul.f32 %v173, 0.70710677
  %v220 = vmul.f32 %v178, 0.70710677
  %v221 = vmul.f32 %v181, 0.70710677
  %v222 = vmul.f32 %v186, 0.70710677
  %v223 = vmul.f32 %v189, 0.70710677
  %v224 = verf.f32.pop %v208
  %v225 = verf.f32.pop %v209
  %v226 = verf.f32.pop %v210
  %v227 = verf.f32.pop %v211
  %v228 = verf.f32.pop %v212
  %v229 = verf.f32.pop %v213
  %v230 = verf.f32.pop %v214
  %v231 = verf.f32.pop %v215
  %v232 = verf.f32.pop %v216
  %v233 = verf.f32.pop %v217
  %v234 = verf.f32.pop %v218
  %v235 = verf.f32.pop %v219
  %v236 = verf.f32.pop %v220
  %v237 = verf.f32.pop %v221
  %v238 = verf.f32.pop %v222
  %v239 = verf.f32.pop %v223
  %v240 = vadd.f32 %v224, 1.0
  %v241 = vadd.f32 %v225, 1.0
  %v242 = vadd.f32 %v226, 1.0
  %v243 = vadd.f32 %v227, 1.0
  %v244 = vadd.f32 %v228, 1.0
  %v245 = vadd.f32 %v229, 1.0
  %v246 = vadd.f32 %v230, 1.0
  %v247 = vadd.f32 %v231, 1.0
  %v248 = vadd.f32 %v232, 1.0
  %v249 = vadd.f32 %v233, 1.0
  %v250 = vadd.f32 %v234, 1.0
  %v251 = vadd.f32 %v235, 1.0
  %v252 = vadd.f32 %v236, 1.0
  %v253 = vadd.f32 %v237, 1.0
  %v254 = vadd.f32 %v238, 1.0
  %v255 = vadd.f32 %v239, 1.0
  %v256 = vmul.f32 %v192, %v240
  %v257 = vmul.f32 %v193, %v241
  %v258 = vmul.f32 %v194, %v242
  %v259 = vmul.f32 %v195, %v243
  %v260 = vmul.f32 %v196, %v244
  %v261 = vmul.f32 %v197, %v245
  %v262 = vmul.f32 %v198, %v246
  %v263 = vmul.f32 %v199, %v247
  %v264 = vmul.f32 %v200, %v248
  %v265 = vmul.f32 %v201, %v249
  %v266 = vmul.f32 %v202, %v250
  %v267 = vmul.f32 %v203, %v251
  %v268 = vmul.f32 %v204, %v252
  %v269 = vmul.f32 %v205, %v253
  %v270 = vmul.f32 %v206, %v254
  %v271 = vmul.f32 %v207, %v255
  %v272 = vpack.c.bf16 %v257, %v256
  %v273 = vpack.c.bf16 %v259, %v258
  %v274 = vpack.c.bf16 %v261, %v260
  %v275 = vpack.c.bf16 %v263, %v262
  %v276 = vpack.c.bf16 %v265, %v264
  %v277 = vpack.c.bf16 %v267, %v266
  %v278 = vpack.c.bf16 %v269, %v268
  %v279 = vpack.c.bf16 %v271, %v270
  %v280 = vpack.c.bf16 %v39, %v38
  %v281 = vpack.c.bf16 %v41, %v40
  %v282 = vpack.c.bf16 %v43, %v42
  %v283 = vpack.c.bf16 %v45, %v44
  %v284 = vpack.c.bf16 %v47, %v46
  %v285 = vpack.c.bf16 %v49, %v48
  %v286 = vpack.c.bf16 %v51, %v50
  %v287 = vpack.c.bf16 %v53, %v52
  %v288 = vlaneseq
  %v289 = vshrl.u32 %v288, 7
  %v290 = vsub.s32 0, %v289
  %v291 = vrot.slane %v55, %v290
  %292 = vmatprep.subr.bf16.mxu0 0
  %293 = vmatpush1.bf16.msra.mxu0 %v287
  %294 = vmatprep.subr.bf16.mxu0 0
  %295 = vmatpush1.bf16.msra.mxu0 %v286
  %296 = vmatprep.subr.bf16.mxu0 0
  %297 = vmatpush1.bf16.msra.mxu0 %v285
  %298 = vmatprep.subr.bf16.mxu0 0
  %299 = vmatpush1.bf16.msra.mxu0 %v284
  %300 = vmatprep.subr.bf16.mxu0 0
  %301 = vmatpush1.bf16.msra.mxu0 %v283
  %302 = vmatprep.subr.bf16.mxu0 0
  %303 = vmatpush1.bf16.msra.mxu0 %v282
  %304 = vmatprep.subr.bf16.mxu0 0
  %305 = vmatpush1.bf16.msra.mxu0 %v281
  %306 = vmatprep.subr.bf16.mxu0 0
  %307 = vmatpush1.bf16.msra.mxu0 %v280
  %308 = vmatprep.subr.bf16.mxu0 0
  %309 = vmatpush2.bf16.msra.mxu0 0
  %310 = vmatprep.subr.bf16.mxu0 0
  %311 = vmatpush2.bf16.msra.mxu0 0
  %312 = vmatprep.subr.bf16.mxu0 0
  %313 = vmatpush2.bf16.msra.mxu0 0
  %314 = vmatprep.subr.bf16.mxu0 0
  %315 = vmatpush2.bf16.msra.mxu0 0
  %316 = vmatprep.subr.bf16.mxu0 0
  %317 = vmatpush2.bf16.msra.mxu0 0
  %318 = vmatprep.subr.bf16.mxu0 0
  %319 = vmatpush2.bf16.msra.mxu0 0
  %320 = vmatprep.subr.bf16.mxu0 0
  %321 = vmatpush2.bf16.msra.mxu0 0
  %322 = vmatprep.subr.bf16.mxu0 0
  %323 = vmatpush2.bf16.msra.mxu0 0
  %324 = vmatprep.mubr.bf16.mxu0 0
  %325 = vmatmul.mubr.bf16.gmra.mxu0 %v272
  %v326 = vpop.f32.mrf.mxu0
  %v327 = vadd.f32 %v291, %v326
  %v328 = vpop.f32.mrf.mxu0
  %v329 = vpop.f32.mrf.mxu0
  %v330 = vadd.f32 %v291, %v329
  %v331 = vpop.f32.mrf.mxu0
  %332 = vmatprep.mubr.bf16.mxu0 0
  %333 = vmatmul.mubr.bf16.gmra.mxu0 %v273
  %v334 = vpop.f32.mrf.mxu0
  %v335 = vadd.f32 %v291, %v334
  %v336 = vpop.f32.mrf.mxu0
  %v337 = vpop.f32.mrf.mxu0
  %v338 = vadd.f32 %v291, %v337
  %v339 = vpop.f32.mrf.mxu0
  %340 = vmatprep.mubr.bf16.mxu0 0
  %341 = vmatmul.mubr.bf16.gmra.mxu0 %v274
  %v342 = vpop.f32.mrf.mxu0
  %v343 = vadd.f32 %v291, %v342
  %v344 = vpop.f32.mrf.mxu0
  %v345 = vpop.f32.mrf.mxu0
  %v346 = vadd.f32 %v291, %v345
  %v347 = vpop.f32.mrf.mxu0
  %348 = vmatprep.mubr.bf16.mxu0 0
  %349 = vmatmul.mubr.bf16.gmra.mxu0 %v275
  %v350 = vpop.f32.mrf.mxu0
  %v351 = vadd.f32 %v291, %v350
  %v352 = vpop.f32.mrf.mxu0
  %v353 = vpop.f32.mrf.mxu0
  %v354 = vadd.f32 %v291, %v353
  %v355 = vpop.f32.mrf.mxu0
  %356 = vmatprep.mubr.bf16.mxu0 0
  %357 = vmatmul.mubr.bf16.gmra.mxu0 %v276
  %v358 = vpop.f32.mrf.mxu0
  %v359 = vadd.f32 %v291, %v358
  %v360 = vpop.f32.mrf.mxu0
  %v361 = vpop.f32.mrf.mxu0
  %v362 = vadd.f32 %v291, %v361
  %v363 = vpop.f32.mrf.mxu0
  %364 = vmatprep.mubr.bf16.mxu0 0
  %365 = vmatmul.mubr.bf16.gmra.mxu0 %v277
  %v366 = vpop.f32.mrf.mxu0
  %v367 = vadd.f32 %v291, %v366
  %v368 = vpop.f32.mrf.mxu0
  %v369 = vpop.f32.mrf.mxu0
  %v370 = vadd.f32 %v291, %v369
  %v371 = vpop.f32.mrf.mxu0
  %372 = vmatprep.mubr.bf16.mxu0 0
  %373 = vmatmul.mubr.bf16.gmra.mxu0 %v278
  %v374 = vpop.f32.mrf.mxu0
  %v375 = vadd.f32 %v291, %v374
  %v376 = vpop.f32.mrf.mxu0
  %v377 = vpop.f32.mrf.mxu0
  %v378 = vadd.f32 %v291, %v377
  %v379 = vpop.f32.mrf.mxu0
  %380 = vmatprep.mubr.bf16.mxu0 0
  %381 = vmatmul.mubr.bf16.gmra.mxu0 %v279
  %v382 = vpop.f32.mrf.mxu0
  %v383 = vadd.f32 %v291, %v382
  %v384 = vpop.f32.mrf.mxu0
  %v385 = vpop.f32.mrf.mxu0
  %v386 = vadd.f32 %v291, %v385
  %v387 = vpop.f32.mrf.mxu0
  %388 = vdwg.mxu0
  %389 = vst.msk [vmem:[%s4] sm:$0xff] %vm70, %v327
  %390 = vst.msk [vmem:[%s4 + $0x8] sm:$0xff] %vm70, %v330
  %391 = vst.msk [vmem:[%s4 + $0x10] sm:$0xff] %vm70, %v335
  %392 = vst.msk [vmem:[%s4 + $0x18] sm:$0xff] %vm70, %v338
  %393 = vst.msk [vmem:[%s4 + $0x20] sm:$0xff] %vm70, %v343
  %394 = vst.msk [vmem:[%s4 + $0x28] sm:$0xff] %vm70, %v346
  %395 = vst.msk [vmem:[%s4 + $0x30] sm:$0xff] %vm70, %v351
  %396 = vst.msk [vmem:[%s4 + $0x38] sm:$0xff] %vm70, %v354
  %397 = vst.msk [vmem:[%s4 + $0x40] sm:$0xff] %vm70, %v359
  %398 = vst.msk [vmem:[%s4 + $0x48] sm:$0xff] %vm70, %v362
  %399 = vst.msk [vmem:[%s4 + $0x50] sm:$0xff] %vm70, %v367
  %400 = vst.msk [vmem:[%s4 + $0x58] sm:$0xff] %vm70, %v370
  %401 = vst.msk [vmem:[%s4 + $0x60] sm:$0xff] %vm70, %v375
  %402 = vst.msk [vmem:[%s4 + $0x68] sm:$0xff] %vm70, %v378
  %403 = vst.msk [vmem:[%s4 + $0x70] sm:$0xff] %vm70, %v383
  %404 = vst.msk [vmem:[%s4 + $0x78] sm:$0xff] %vm70, %v386
  // Predicated region
  $region18: #{tpu_custom_call.1} parent=0 // pred_check
    _
  $region19: #{tpu_custom_call.1} parent=0 // pred_check_branch
    %406 = sbr.rel (0) target = $region21
  $region20: #{tpu_custom_call.1} parent=0 // pred_region
    _
  $region21: #{tpu_custom_call.1} parent=0 // pred_fallthru
    _
  // Predicated region
  $region22: #{tpu_custom_call.1} parent=0 // pred_check
    _
  $region23: #{tpu_custom_call.1} parent=0 // pred_check_branch
    %408 = sbr.rel (0) target = $region25
  $region24: #{tpu_custom_call.1} parent=0 // pred_region
    _
  $region25: #{tpu_custom_call.1} parent=0 // pred_fallthru
    _

</llo_original>
